<compile_context>
chip_gen: v5e
topology: v5e:2x2
jax: 0.10.0
libtpu: 0.0.40
codegen_flags: <defaults>
</compile_context>

<pallas_src>
import functools

import numpy as np
import jax
import jax.numpy as jnp
from jax import lax
from jax.experimental import pallas as pl
from jax.experimental.pallas import tpu as pltpu


# --------------------------------------------------------------------------- #
# pe table (one-time, host)
# --------------------------------------------------------------------------- #
def make_positional_encoding_table(max_len: int, d_model: int) -> jnp.ndarray:
    """Deterministic construction of the `pe` buffer, shape (max_len, d_model)."""
    position = np.arange(0, max_len, dtype=np.float32)[:, None]            # (L, 1)
    div_term = np.exp(
        np.arange(0, d_model, 2, dtype=np.float32) * (-np.log(10000.0) / d_model)
    )                                                                       # (D/2,)
    pe = np.zeros((max_len, d_model), dtype=np.float32)
    pe[:, 0::2] = np.sin(position * div_term)
    pe[:, 1::2] = np.cos(position * div_term)
    return jnp.asarray(pe)


# --------------------------------------------------------------------------- #
# int32 helpers for the counter-based hash
# --------------------------------------------------------------------------- #
def _s32(v: int) -> int:
    """Reinterpret an unsigned 32-bit constant as a signed int32 Python int."""
    v &= 0xFFFFFFFF
    return v - 0x100000000 if v >= 0x80000000 else v


_GOLDEN = _s32(0x9E3779B9)
_FMIX_C1 = _s32(0x85EBCA6B)
_FMIX_C2 = _s32(0xC2B2AE35)
_SIGN_BIT = _s32(0x80000000)           # == -2**31


# --------------------------------------------------------------------------- #
# Kernels
# --------------------------------------------------------------------------- #
def _pe_add_kernel(x_ref, pe_ref, o_ref):
    # x_ref: (tS, B, D); pe_ref: (tS, D) -> broadcast over batch in-kernel
    # (sublane broadcast is XLU/relayout work, hidden under the HBM DMA).
    pe_b = pe_ref[...][:, None, :]
    o_ref[...] = (x_ref[...] + pe_b).astype(o_ref.dtype)


def _pe_add_dropout_kernel(seed_ref, x_ref, pe_ref, o_ref, *,
                           thr_flipped, inv_keep_prob):
    tS, B, D = x_ref.shape

    # Add in f32 (pe is f32), then drop to the output dtype so the select /
    # scale below runs in bf16 on v6e/v7x when x is bf16.
    pe_b = pe_ref[...][:, None, :]
    y = (x_ref[...] + pe_b).astype(o_ref.dtype)

    # ---- stateless counter-based PRNG (Murmur3 fmix32 on the global index) --
    # Works on every backend (no TPU-only prng primitives) and the mask does
    # not depend on the tile size / grid.  int32 throughout; logical right
    # shifts are emulated with arithmetic shift + mask.
    row0 = pl.program_id(0) * tS
    shp = (tS, B, D)
    r = lax.broadcasted_iota(jnp.int32, shp, 0) + row0
    b = lax.broadcasted_iota(jnp.int32, shp, 1)
    d = lax.broadcasted_iota(jnp.int32, shp, 2)
    idx = (r * jnp.int32(B) + b) * jnp.int32(D) + d      # wraps mod 2^32 (fine)

    h = idx ^ (seed_ref[0] * jnp.int32(_GOLDEN))
    h = h ^ ((h >> 16) & 0xFFFF)
    h = h * jnp.int32(_FMIX_C1)
    h = h ^ ((h >> 13) & 0x7FFFF)
    h = h * jnp.int32(_FMIX_C2)
    h = h ^ ((h >> 16) & 0xFFFF)

    # Unsigned compare (bits >= floor(p * 2^32)) via sign-bit flip:
    # P(keep) = 1 - p (bias < 2^-32 toward keeping, negligible).
    keep = (h ^ jnp.int32(_SIGN_BIT)) >= jnp.int32(thr_flipped)

    scale = jnp.asarray(inv_keep_prob, dtype=y.dtype)
    o_ref[...] = jnp.where(keep, y * scale, jnp.zeros_like(y))


# --------------------------------------------------------------------------- #
# Tiling
# --------------------------------------------------------------------------- #
def _round_up(value: int, multiple: int) -> int:
    return (value + multiple - 1) // multiple * multiple


def _choose_seq_tile(S: int, B: int, D: int, itemsize: int) -> int:
    """Sequence tile: ~2 MiB per pipelined x/out buffer and >= 8 grid steps.

    Invariant: the returned tile is a multiple of 8 (so the 2-D (tS, D) pe
    block is sublane-aligned) or equal to S.
    """
    d_pad = _round_up(D, 128)                        # lane dim pads to 128
    b_pad = _round_up(B, max(8, 32 // itemsize))     # sublane dim pads to native tile
    x_row_bytes = b_pad * d_pad * itemsize           # one padded (B, D) slab
    # ~2 MiB blocks already reach ~85% of the HBM roofline; larger tiles only
    # shrink the grid (defeating double-buffering and v7x 2-TC sharding) and
    # eat the VMEM headroom the dropout temporaries need.
    tile = max(1, (2 * 1024 * 1024) // x_row_bytes)
    # Keep >= 8 grid steps (>= 4 per TensorCore on v7x) when S allows it.
    tile = min(tile, max(1, pl.cdiv(S, 8)))
    tile = min(tile, S)
    if tile < S:
        tile = min(S, max(8, (tile // 8) * 8))
    if tile < S and S % tile != 0:
        # Prefer a divisor of S (still a multiple of 8, >= tile/2) so the last
        # grid step is not a masked partial store.
        for cand in range(tile, max(8, tile // 2) - 1, -8):
            if S % cand == 0:
                return cand
    return tile


# --------------------------------------------------------------------------- #
# Forward
# --------------------------------------------------------------------------- #
def positional_encoding_forward(
    x: jnp.ndarray,
    pe_table: jnp.ndarray,
    *,
    dropout_p: float = 0.1,
    training: bool = False,
    seed: int = 0,
    seq_tile=None,
) -> jnp.ndarray:
    """x: (S, B, D).  pe_table: (max_len, D) float32.  Returns dropout(x + pe[:S])."""
    S, B, D = x.shape
    if pe_table.shape[0] < S or pe_table.shape[1] != D:
        raise ValueError(
            f"pe_table shape {pe_table.shape} incompatible with x shape {x.shape}")

    itemsize = jnp.dtype(x.dtype).itemsize
    tS = seq_tile if seq_tile is not None else _choose_seq_tile(S, B, D, itemsize)
    tS = max(1, min(int(tS), S))
    grid = (pl.cdiv(S, tS),)

    # pe stays 2-D; pass the full table (no host-side slice/copy) when the
    # tile is sublane-aligned, otherwise slice so the block equals the full dim.
    pe_in = pe_table if tS % 8 == 0 else pe_table[:S]

    out_shape = jax.ShapeDtypeStruct((S, B, D), x.dtype)
    compiler_params = pltpu.CompilerParams(
        dimension_semantics=("parallel",),           # shards grid across v7x's 2 TCs
        vmem_limit_bytes=32 * 1024 * 1024,           # ample for ~2 MiB blocks, v7x-safe
    )

    use_dropout = training and dropout_p > 0.0
    if not use_dropout:
        # Inference fast path: x aliased to the output (in place when donated).
        return pl.pallas_call(
            _pe_add_kernel,
            out_shape=out_shape,
            grid_spec=pltpu.PrefetchScalarGridSpec(
                num_scalar_prefetch=0,
                grid=grid,
                in_specs=[
                    pl.BlockSpec((tS, B, D), lambda i: (i, 0, 0)),
                    pl.BlockSpec((tS, D), lambda i: (i, 0)),
                ],
                out_specs=pl.BlockSpec((tS, B, D), lambda i: (i, 0, 0)),
            ),
            compiler_params=compiler_params,
            input_output_aliases={0: 0},             # x -> out (unambiguous here)
        )(x, pe_in)

    if not 0.0 < dropout_p < 1.0:
        raise ValueError(f"dropout_p must be in (0, 1) when training, got {dropout_p}")
    threshold = min(int(dropout_p * 4294967296.0), 4294967295)   # floor(p * 2^32)
    kernel = functools.partial(
        _pe_add_dropout_kernel,
        thr_flipped=_s32(threshold ^ 0x80000000),    # threshold in sign-flipped space
        inv_keep_prob=1.0 / (1.0 - dropout_p),
    )
    seed_arr = jnp.asarray([_s32(int(seed))], dtype=jnp.int32)
    return pl.pallas_call(
        kernel,
        out_shape=out_shape,
        grid_spec=pltpu.PrefetchScalarGridSpec(
            num_scalar_prefetch=1,                   # seed lands in SMEM
            grid=grid,
            in_specs=[
                pl.BlockSpec((tS, B, D), lambda i, seed_ref: (i, 0, 0)),
                pl.BlockSpec((tS, D), lambda i, seed_ref: (i, 0)),
            ],
            out_specs=pl.BlockSpec((tS, B, D), lambda i, seed_ref: (i, 0, 0)),
        ),
        compiler_params=compiler_params,
        # No alias here: operand indexing with scalar-prefetch args is ambiguous.
    )(seed_arr, x, pe_in)


# --------------------------------------------------------------------------- #
# Self-test
# --------------------------------------------------------------------------- #
if __name__ == "__main__":
    # Small shapes consistent with the module: seq=8, batch=2, d_model=32.
    S, B, D = 8, 2, 32
    MAX_LEN = 64  # module default is 5000; kept small for the demo table

    key = jax.random.PRNGKey(0)
    x = jax.random.normal(key, (S, B, D), dtype=jnp.float32)
    pe_table = make_positional_encoding_table(MAX_LEN, D)

    # Reference computed *before* the kernel calls.
    pe_np = np.asarray(pe_table)
    ref = np.asarray(x) + pe_np[:S][:, None, :]

    # Eval mode (dropout = identity), matching module.eval() semantics.
    out_eval = jax.block_until_ready(
        positional_encoding_forward(x, pe_table, dropout_p=0.1, training=False))
    np.testing.assert_allclose(np.asarray(out_eval), ref, rtol=1e-6, atol=1e-6)

    # Training mode: inverted dropout from the counter-based hash.
    p = 0.1
    out_train = jax.block_until_ready(
        positional_encoding_forward(x, pe_table, dropout_p=p, training=True, seed=1234))
    out_train = np.asarray(out_train)
    assert out_train.shape == (S, B, D) and np.all(np.isfinite(out_train))
    kept = out_train != 0.0
    np.testing.assert_allclose(
        out_train[kept], (ref * np.float32(1.0 / (1.0 - p)))[kept],
        rtol=1e-5, atol=1e-6)
    drop_frac = 1.0 - kept.mean()
    assert 0.0 < drop_frac < 0.35, f"implausible dropout fraction: {drop_frac}"

    # Non-divisible sequence (masked tail block) + tiling-invariance of the mask.
    S2 = 20
    x2 = jax.random.normal(jax.random.PRNGKey(1), (S2, B, D), dtype=jnp.float32)
    ref2 = np.asarray(x2) + pe_np[:S2][:, None, :]
    out2_eval = jax.block_until_ready(
        positional_encoding_forward(x2, pe_table, training=False, seq_tile=8))
    np.testing.assert_allclose(np.asarray(out2_eval), ref2, rtol=1e-6, atol=1e-6)
    out2_a = jax.block_until_ready(
        positional_encoding_forward(x2, pe_table, dropout_p=p, training=True,
                                    seed=7, seq_tile=8))
    out2_b = jax.block_until_ready(
        positional_encoding_forward(x2, pe_table, dropout_p=p, training=True,
                                    seed=7, seq_tile=20))
    np.testing.assert_array_equal(np.asarray(out2_a), np.asarray(out2_b))

    print("KERNEL_OK")
</pallas_src>

<mosaic_0001>
module attributes {stable_mosaic.version = 11 : i64} {
  func.func @_pe_add_kernel(%arg0: i32, %arg1: memref<8x2x32xf32, #tpu.memory_space<vmem>>, %arg2: memref<8x32xf32, #tpu.memory_space<vmem>>, %arg3: memref<8x2x32xf32, #tpu.memory_space<vmem>>) attributes {dimension_semantics = [#tpu.dimension_semantics<parallel>], iteration_bounds = array<i64: 1>, scalar_prefetch = 0 : i64, scratch_operands = 0 : i64, tpu.core_type = #tpu.core_type<tc>, window_params = [{transform_indices = @transform_0, window_bounds = array<i64: 8, 2, 32>}, {transform_indices = @transform_1, window_bounds = array<i64: 8, 32>}, {transform_indices = @transform_2, window_bounds = array<i64: 8, 2, 32>}]} {
    %c0 = arith.constant 0 : index
    %c0_0 = arith.constant 0 : index
    %0 = vector.load %arg2[%c0, %c0_0] : memref<8x32xf32, #tpu.memory_space<vmem>>, vector<8x32xf32>
    %1 = vector.shape_cast %0 : vector<8x32xf32> to vector<8x1x32xf32>
    %c0_1 = arith.constant 0 : index
    %c0_2 = arith.constant 0 : index
    %c0_3 = arith.constant 0 : index
    %2 = vector.load %arg1[%c0_1, %c0_2, %c0_3] : memref<8x2x32xf32, #tpu.memory_space<vmem>>, vector<8x2x32xf32>
    %3 = vector.broadcast %1 : vector<8x1x32xf32> to vector<8x2x32xf32>
    %4 = arith.addf %2, %3 : vector<8x2x32xf32>
    %c0_4 = arith.constant 0 : index
    %c0_5 = arith.constant 0 : index
    %c0_6 = arith.constant 0 : index
    %5 = vector.load %arg3[%c0_4, %c0_5, %c0_6] : memref<8x2x32xf32, #tpu.memory_space<vmem>>, vector<8x2x32xf32>
    tpu.vector_store %arg3[%c0_4, %c0_5, %c0_6], %4 {strides = array<i32>} : memref<8x2x32xf32, #tpu.memory_space<vmem>>, vector<8x2x32xf32>,
    return
  }
  func.func @transform_0(%arg0: i32) -> (i32, i32, i32) {
    %c0_i32 = arith.constant 0 : i32
    %c0_i32_0 = arith.constant 0 : i32
    %c0_i32_1 = arith.constant 0 : i32
    return %arg0, %c0_i32, %c0_i32_0 : i32, i32, i32
  }
  func.func @transform_1(%arg0: i32) -> (i32, i32) {
    %c0_i32 = arith.constant 0 : i32
    %c0_i32_0 = arith.constant 0 : i32
    return %arg0, %c0_i32 : i32, i32
  }
  func.func @transform_2(%arg0: i32) -> (i32, i32, i32) {
    %c0_i32 = arith.constant 0 : i32
    %c0_i32_0 = arith.constant 0 : i32
    %c0_i32_1 = arith.constant 0 : i32
    return %arg0, %c0_i32, %c0_i32_0 : i32, i32, i32
  }
}

</mosaic_0001>

<llo_original>
// kernel: tpu_custom_call.1
$region0: #{tpu_custom_call.1}
  #allocation0 [shape = 'u32[]', space=smem, size = 0x4, offset = 0x4, fixed_abs, tag = 'smem constant byte address 0x4 - core index']
  #allocation1 [shape = 'u32[72,128]{1,0:T(1,128)}', space=vmem, size = 0x9000, scoped, tag = 'internal scratch']
  %s0 = inlined_call_operand.hbm [shape: f32[8,2,32], index: 0, kind: input, shape index: {}, may-alias: {0,2}]
  %s1 = inlined_call_operand.vmem [shape: f32[64,32], index: 1, kind: input, shape index: {}]
  %s2 = inlined_call_operand.hbm [shape: f32[8,2,32], index: 2, kind: output, shape index: {}, may-alias: {0,2}]
  %s3 = sld [smem:[#allocation0]]
  $region22: #{tpu_custom_call.1} parent=0
    _
  %s5 = ssub.s32 1, %s3
  %s6 = scalar_select 0, %s5, %s3
  $region1: #{tpu_custom_call.1} parent=0
    #allocation2 [shape = 'u8[8192]{0}', space=vmem, size = 0x2000, scoped, tag = 'input window, operand 0, single buffered']
    #allocation3 [shape = 's32[1]{0}', space=sflag, size = 0x4, scoped, tag = 'scoped memory for tpu_custom_call.1']
    #allocation4 [shape = 's32[1]{0}', space=sflag, size = 0x4, scoped, tag = 'scoped memory for tpu_custom_call.1']
    #allocation5 [shape = 'u8[8192]{0}', space=vmem, size = 0x2000, scoped, tag = 'output window, operand 0, single buffered']
    %7 = vsyncpa [#allocation3], 0
    %8 = vsyncpa [#allocation4], 0
    // Predicated region
    $region2: #{tpu_custom_call.1} parent=1 // pred_check
      _
    $region3: #{tpu_custom_call.1} parent=1 // pred_check_branch
      %10 = sbr.rel (0) target = $region5
    $region4: #{tpu_custom_call.1} parent=1 // pred_region
      %12 = vsyncadd [#allocation3], 0
      %s13 = sshll.u32 %s0, 4
      %s14 = int_to_ptr.hbm [resolvable:$true] %s13
      %s15 = sshll.u32 [#allocation2], 4
      %s16 = int_to_ptr.vmem [resolvable:$true] %s15
      %21 = dma.hbm_to_vmem [thread:$0]  %s14, 256, %s16, [#allocation3], 32, 32, 2
    $region5: #{tpu_custom_call.1} parent=1 // pred_fallthru
      _
    // Predicated region
    $region6: #{tpu_custom_call.1} parent=1 // pred_check
      _
    $region7: #{tpu_custom_call.1} parent=1 // pred_check_branch
      %23 = sbr.rel (0) target = $region9
    $region8: #{tpu_custom_call.1} parent=1 // pred_region
      _
    $region9: #{tpu_custom_call.1} parent=1 // pred_fallthru
      _
    // Predicated region
    $region10: #{tpu_custom_call.1} parent=1 // pred_check
      _
    $region11: #{tpu_custom_call.1} parent=1 // pred_check_branch
      %25 = sbr.rel (0) target = $region13
    $region12: #{tpu_custom_call.1} parent=1 // pred_region
      %27 = dma.done [#allocation3], 256
    $region13: #{tpu_custom_call.1} parent=1 // pred_fallthru
      _
    %v28 = vld [vmem:[%s1] sm:$0xff]
    %v30 = vrot.slane %v28, 1
    %v31 = vrot.slane %v28, 2
    %v32 = vrot.slane %v28, 3
    %v33 = vrot.slane %v28, 4
    %v34 = vrot.slane %v28, 5
    %v35 = vrot.slane %v28, 6
    %v36 = vrot.slane %v28, 7
    %v37 = vld [vmem:[#allocation2] sm:$0x3]
    %v38 = vld [vmem:[#allocation2 + $0x2] sm:$0x3]
    %v39 = vld [vmem:[#allocation2 + $0x4] sm:$0x3]
    %v40 = vld [vmem:[#allocation2 + $0x6] sm:$0x3]
    %v41 = vld [vmem:[#allocation2 + $0x8] sm:$0x3]
    %v42 = vld [vmem:[#allocation2 + $0xa] sm:$0x3]
    %v43 = vld [vmem:[#allocation2 + $0xc] sm:$0x3]
    %v44 = vld [vmem:[#allocation2 + $0xe] sm:$0x3]
    %v45 = vperm.slane %v28, 0
    %v46 = vperm.slane %v30, 0
    %v47 = vperm.slane %v31, 0
    %v48 = vperm.slane %v32, 0
    %v49 = vperm.slane %v33, 0
    %v50 = vperm.slane %v34, 0
    %v51 = vperm.slane %v35, 0
    %v52 = vperm.slane %v36, 0
    %v61 = vadd.f32 %v37, %v45
    %v62 = vadd.f32 %v38, %v46
    %v63 = vadd.f32 %v39, %v47
    %v64 = vadd.f32 %v40, %v48
    %v65 = vadd.f32 %v41, %v49
    %v66 = vadd.f32 %v42, %v50
    %v67 = vadd.f32 %v43, %v51
    %v68 = vadd.f32 %v44, %v52
    %vm69 = vcmask 254976
    %70 = vst.msk [vmem:[#allocation5] sm:$0x3] %vm69, %v61
    %71 = vst.msk [vmem:[#allocation5 + $0x2] sm:$0x3] %vm69, %v62
    %72 = vst.msk [vmem:[#allocation5 + $0x4] sm:$0x3] %vm69, %v63
    %73 = vst.msk [vmem:[#allocation5 + $0x6] sm:$0x3] %vm69, %v64
    %74 = vst.msk [vmem:[#allocation5 + $0x8] sm:$0x3] %vm69, %v65
    %75 = vst.msk [vmem:[#allocation5 + $0xa] sm:$0x3] %vm69, %v66
    %76 = vst.msk [vmem:[#allocation5 + $0xc] sm:$0x3] %vm69, %v67
    %77 = vst.msk [vmem:[#allocation5 + $0xe] sm:$0x3] %vm69, %v68
    // Predicated region
    $region14: #{tpu_custom_call.1} parent=1 // pred_check
      _
    $region15: #{tpu_custom_call.1} parent=1 // pred_check_branch
      %79 = sbr.rel (0) target = $region17
    $region16: #{tpu_custom_call.1} parent=1 // pred_region
      %81 = vsyncadd [#allocation4], 0
      %s82 = sshll.u32 [#allocation5], 4
      %s83 = int_to_ptr.vmem [resolvable:$true] %s82
      %s84 = sshll.u32 %s2, 4
      %s85 = int_to_ptr.hbm [resolvable:$true] %s84
      %90 = dma.vmem_to_hbm [thread:$0]  %s83, 256, %s85, [#allocation4], 32, 32, 2
    $region17: #{tpu_custom_call.1} parent=1 // pred_fallthru
      _
    // Predicated region
    $region18: #{tpu_custom_call.1} parent=1 // pred_check
      _
    $region19: #{tpu_custom_call.1} parent=1 // pred_check_branch
      %92 = sbr.rel (0) target = $region21
    $region20: #{tpu_custom_call.1} parent=1 // pred_region
      %94 = dma.done [#allocation4], 256
    $region21: #{tpu_custom_call.1} parent=1 // pred_fallthru
      _
    %95 = vsyncpa [#allocation3], 1
    %96 = vsyncpa [#allocation4], 1

</llo_original>
